<compile_context>
chip_gen: v7x
topology: tpu7x:2x2x1
jax: 0.10.0
libtpu: 0.0.40
codegen_flags: <defaults>
</compile_context>

<pallas_src>
import functools

import numpy as np

import jax
import jax.numpy as jnp
from jax.experimental import pallas as pl
from jax.experimental.pallas import tpu as pltpu

H1 = 128        # fc1 out
H2 = 128        # fc2 out
H3 = 64         # fc3 out (true width; full-array block widths < 128 are allowed)
OUT_PAD = 128   # fc4 out, padded action_dim -> 128 (extra columns are zero) for lane-dense stores


def _round_up(x, m):
    return (x + m - 1) // m * m


def dqn_kernel(x_ref,
               w1_ref, b1_ref,
               w2_ref, b2_ref,
               w3_ref, b3_ref,
               w4_ref, b4_ref,
               out_ref):
    """4-layer MLP forward on one (TB, state_dim) batch tile.

    Input arrives f32 and is cast to the weights' dtype (bf16 by default) in-kernel;
    dots accumulate in f32 on the MXU, bias-add / ReLU run in f32, then cast back
    before the next dot.
    """
    dt = w1_ref.dtype
    x = x_ref[...].astype(dt)
    h = jnp.dot(x, w1_ref[...], preferred_element_type=jnp.float32) + b1_ref[...]
    h = jnp.maximum(h, 0.0).astype(dt)
    h = jnp.dot(h, w2_ref[...], preferred_element_type=jnp.float32) + b2_ref[...]
    h = jnp.maximum(h, 0.0).astype(dt)
    h = jnp.dot(h, w3_ref[...], preferred_element_type=jnp.float32) + b3_ref[...]
    h = jnp.maximum(h, 0.0).astype(dt)
    out = jnp.dot(h, w4_ref[...], preferred_element_type=jnp.float32) + b4_ref[...]
    out_ref[...] = out.astype(out_ref.dtype)


@functools.partial(jax.jit,
                   static_argnames=("action_dim", "block_batch", "out_dtype"))
def dqn_forward(x, params, *, action_dim, block_batch=1024, out_dtype=jnp.float32):
    (w1, b1), (w2, b2), (w3, b3), (w4, b4) = params
    B, state_dim = x.shape

    # Batch tile: forced to a multiple of 8 sublanes and large enough to amortize
    # per-grid-step pipeline overhead.  B is padded so no block touches garbage rows.
    B8 = _round_up(max(B, 1), 8)
    TB = _round_up(min(block_batch, B8), 8)
    # v7x: dimension_semantics=("parallel",) only uses both TensorCores if the grid
    # has >= 2 steps.  If the whole (non-trivial) batch would fit in one tile, split it.
    if B8 <= TB and TB >= 128:
        TB = _round_up((B8 + 1) // 2, 8)
    B_pad = _round_up(B, TB)

    x_p = x  # stays f32; cast happens inside the kernel
    if B_pad != B:
        x_p = jnp.pad(x_p, ((0, B_pad - B), (0, 0)))

    grid = (B_pad // TB,)

    def act_spec(feat):
        return pl.BlockSpec((TB, feat), lambda i: (i, 0))

    def const_spec(shape):
        # Same block every grid step -> VMEM-resident; single-buffer it.
        return pl.BlockSpec(shape, lambda i: (0, 0), pipeline_mode=pl.Buffered(1))

    weights = (w1, b1, w2, b2, w3, b3, w4, b4)
    flops = 2 * B_pad * (state_dim * H1 + H1 * H2 + H2 * H3 + H3 * OUT_PAD)
    bytes_accessed = (
        int(x_p.size) * x_p.dtype.itemsize
        + B_pad * OUT_PAD * np.dtype(out_dtype).itemsize
        + sum(int(a.size) * a.dtype.itemsize for a in weights))

    out = pl.pallas_call(
        dqn_kernel,
        out_shape=jax.ShapeDtypeStruct((B_pad, OUT_PAD), out_dtype),
        grid=grid,
        in_specs=[
            act_spec(state_dim),
            const_spec(w1.shape), const_spec(b1.shape),
            const_spec(w2.shape), const_spec(b2.shape),
            const_spec(w3.shape), const_spec(b3.shape),
            const_spec(w4.shape), const_spec(b4.shape),
        ],
        out_specs=pl.BlockSpec((TB, OUT_PAD), lambda i: (i, 0)),
        compiler_params=pltpu.CompilerParams(
            dimension_semantics=("parallel",)),
        cost_estimate=pl.CostEstimate(
            flops=int(flops), transcendentals=0, bytes_accessed=int(bytes_accessed)),
    )(x_p, *weights)

    return out[:B, :action_dim]


def init_linear(key, in_features, out_features, *, pad_out=None, dtype=jnp.bfloat16):
    """torch.nn.Linear default init U(-1/sqrt(in), 1/sqrt(in)); stored as [in, out]
    (transpose of PyTorch); output optionally zero-padded to a lane-dense width."""
    kw, kb = jax.random.split(key)
    bound = 1.0 / (in_features ** 0.5)
    w = jax.random.uniform(kw, (in_features, out_features), jnp.float32,
                           minval=-bound, maxval=bound)
    b = jax.random.uniform(kb, (1, out_features), jnp.float32,
                           minval=-bound, maxval=bound)
    pad_out = out_features if pad_out is None else pad_out
    w = jnp.pad(w, ((0, 0), (0, pad_out - out_features)))
    b = jnp.pad(b, ((0, 0), (0, pad_out - out_features)))
    # Weights in MXU dtype (bf16 default); biases stay f32 (added post-dot in f32).
    return w.astype(dtype), b.astype(jnp.float32)


def init_dqn_params(key, state_dim, action_dim, dtype=jnp.bfloat16):
    k1, k2, k3, k4 = jax.random.split(key, 4)
    return (
        init_linear(k1, state_dim, H1, dtype=dtype),
        init_linear(k2, H1, H2, dtype=dtype),
        init_linear(k3, H2, H3, dtype=dtype),                      # true 64-wide fc3
        init_linear(k4, H3, action_dim, pad_out=OUT_PAD, dtype=dtype),  # pad N only (zeros)
    )


def dqn_reference(x, params, action_dim):
    """Plain-JAX reference mirroring the kernel's dtype strategy."""
    (w1, b1), (w2, b2), (w3, b3), (w4, b4) = params
    dt = w1.dtype
    h = x.astype(dt)
    h = jnp.maximum(jnp.dot(h, w1, preferred_element_type=jnp.float32) + b1, 0.0).astype(dt)
    h = jnp.maximum(jnp.dot(h, w2, preferred_element_type=jnp.float32) + b2, 0.0).astype(dt)
    h = jnp.maximum(jnp.dot(h, w3, preferred_element_type=jnp.float32) + b3, 0.0).astype(dt)
    out = jnp.dot(h, w4, preferred_element_type=jnp.float32) + b4
    return out[:, :action_dim]


if __name__ == "__main__":
    key = jax.random.PRNGKey(0)
    k_params, k_state = jax.random.split(key)

    batch = 8
    state_dim = 16
    action_dim = 4

    params = init_dqn_params(k_params, state_dim, action_dim)
    state = jax.random.normal(k_state, (batch, state_dim), jnp.float32)

    q_values = dqn_forward(state, params, action_dim=action_dim)
    q_values = jax.block_until_ready(q_values)

    ref = dqn_reference(state, params, action_dim)
    assert q_values.shape == (batch, action_dim)
    assert jnp.allclose(q_values, ref, atol=1e-2, rtol=1e-2), (
        f"max abs err {jnp.max(jnp.abs(q_values - ref))}")

    print("KERNEL_OK")
</pallas_src>

<mosaic_0001>
module attributes {stable_mosaic.version = 11 : i64} {
  func.func @dqn_kernel(%arg0: i32, %arg1: memref<8x16xf32, #tpu.memory_space<vmem>>, %arg2: memref<16x128xbf16, #tpu.memory_space<vmem>>, %arg3: memref<1x128xf32, #tpu.memory_space<vmem>>, %arg4: memref<128x128xbf16, #tpu.memory_space<vmem>>, %arg5: memref<1x128xf32, #tpu.memory_space<vmem>>, %arg6: memref<128x64xbf16, #tpu.memory_space<vmem>>, %arg7: memref<1x64xf32, #tpu.memory_space<vmem>>, %arg8: memref<64x128xbf16, #tpu.memory_space<vmem>>, %arg9: memref<1x128xf32, #tpu.memory_space<vmem>>, %arg10: memref<8x128xf32, #tpu.memory_space<vmem>>) attributes {dimension_semantics = [#tpu.dimension_semantics<parallel>], iteration_bounds = array<i64: 1>, scalar_prefetch = 0 : i64, scratch_operands = 0 : i64, tpu.core_type = #tpu.core_type<tc>, window_params = [{transform_indices = @transform_0, window_bounds = array<i64: 8, 16>}, {pipeline_mode = #tpu.pipeline_mode<synchronous>, transform_indices = @transform_1, window_bounds = array<i64: 16, 128>}, {pipeline_mode = #tpu.pipeline_mode<synchronous>, transform_indices = @transform_2, window_bounds = array<i64: 1, 128>}, {pipeline_mode = #tpu.pipeline_mode<synchronous>, transform_indices = @transform_3, window_bounds = array<i64: 128, 128>}, {pipeline_mode = #tpu.pipeline_mode<synchronous>, transform_indices = @transform_4, window_bounds = array<i64: 1, 128>}, {pipeline_mode = #tpu.pipeline_mode<synchronous>, transform_indices = @transform_5, window_bounds = array<i64: 128, 64>}, {pipeline_mode = #tpu.pipeline_mode<synchronous>, transform_indices = @transform_6, window_bounds = array<i64: 1, 64>}, {pipeline_mode = #tpu.pipeline_mode<synchronous>, transform_indices = @transform_7, window_bounds = array<i64: 64, 128>}, {pipeline_mode = #tpu.pipeline_mode<synchronous>, transform_indices = @transform_8, window_bounds = array<i64: 1, 128>}, {transform_indices = @transform_9, window_bounds = array<i64: 8, 128>}]} {
    %c0 = arith.constant 0 : index
    %c0_0 = arith.constant 0 : index
    %0 = vector.load %arg1[%c0, %c0_0] : memref<8x16xf32, #tpu.memory_space<vmem>>, vector<8x16xf32>
    %1 = arith.truncf %0 : vector<8x16xf32> to vector<8x16xbf16>
    %c0_1 = arith.constant 0 : index
    %c0_2 = arith.constant 0 : index
    %2 = vector.load %arg2[%c0_1, %c0_2] : memref<16x128xbf16, #tpu.memory_space<vmem>>, vector<16x128xbf16>
    %cst = arith.constant dense<0.000000e+00> : vector<8x128xf32>
    %3 = tpu.matmul %1, %2, %cst {dimension_numbers = #tpu.dot_dimension_numbers<[1], [0], [0], [1], [0, 0, 1, 1], [], []>} : vector<8x16xbf16>, vector<16x128xbf16>, vector<8x128xf32> -> vector<8x128xf32>
    %c0_3 = arith.constant 0 : index
    %c0_4 = arith.constant 0 : index
    %4 = vector.load %arg3[%c0_3, %c0_4] : memref<1x128xf32, #tpu.memory_space<vmem>>, vector<1x128xf32>
    %5 = vector.broadcast %4 : vector<1x128xf32> to vector<8x128xf32>
    %6 = arith.addf %3, %5 : vector<8x128xf32>
    %cst_5 = arith.constant 0.000000e+00 : f32
    %7 = vector.broadcast %cst_5 : f32 to vector<8x128xf32>
    %8 = arith.maximumf %6, %7 : vector<8x128xf32>
    %9 = arith.truncf %8 : vector<8x128xf32> to vector<8x128xbf16>
    %c0_6 = arith.constant 0 : index
    %c0_7 = arith.constant 0 : index
    %10 = vector.load %arg4[%c0_6, %c0_7] : memref<128x128xbf16, #tpu.memory_space<vmem>>, vector<128x128xbf16>
    %cst_8 = arith.constant dense<0.000000e+00> : vector<8x128xf32>
    %11 = tpu.matmul %9, %10, %cst_8 {dimension_numbers = #tpu.dot_dimension_numbers<[1], [0], [0], [1], [0, 0, 1, 1], [], []>} : vector<8x128xbf16>, vector<128x128xbf16>, vector<8x128xf32> -> vector<8x128xf32>
    %c0_9 = arith.constant 0 : index
    %c0_10 = arith.constant 0 : index
    %12 = vector.load %arg5[%c0_9, %c0_10] : memref<1x128xf32, #tpu.memory_space<vmem>>, vector<1x128xf32>
    %13 = vector.broadcast %12 : vector<1x128xf32> to vector<8x128xf32>
    %14 = arith.addf %11, %13 : vector<8x128xf32>
    %cst_11 = arith.constant 0.000000e+00 : f32
    %15 = vector.broadcast %cst_11 : f32 to vector<8x128xf32>
    %16 = arith.maximumf %14, %15 : vector<8x128xf32>
    %17 = arith.truncf %16 : vector<8x128xf32> to vector<8x128xbf16>
    %c0_12 = arith.constant 0 : index
    %c0_13 = arith.constant 0 : index
    %18 = vector.load %arg6[%c0_12, %c0_13] : memref<128x64xbf16, #tpu.memory_space<vmem>>, vector<128x64xbf16>
    %cst_14 = arith.constant dense<0.000000e+00> : vector<8x64xf32>
    %19 = tpu.matmul %17, %18, %cst_14 {dimension_numbers = #tpu.dot_dimension_numbers<[1], [0], [0], [1], [0, 0, 1, 1], [], []>} : vector<8x128xbf16>, vector<128x64xbf16>, vector<8x64xf32> -> vector<8x64xf32>
    %c0_15 = arith.constant 0 : index
    %c0_16 = arith.constant 0 : index
    %20 = vector.load %arg7[%c0_15, %c0_16] : memref<1x64xf32, #tpu.memory_space<vmem>>, vector<1x64xf32>
    %21 = vector.broadcast %20 : vector<1x64xf32> to vector<8x64xf32>
    %22 = arith.addf %19, %21 : vector<8x64xf32>
    %cst_17 = arith.constant 0.000000e+00 : f32
    %23 = vector.broadcast %cst_17 : f32 to vector<8x64xf32>
    %24 = arith.maximumf %22, %23 : vector<8x64xf32>
    %25 = arith.truncf %24 : vector<8x64xf32> to vector<8x64xbf16>
    %c0_18 = arith.constant 0 : index
    %c0_19 = arith.constant 0 : index
    %26 = vector.load %arg8[%c0_18, %c0_19] : memref<64x128xbf16, #tpu.memory_space<vmem>>, vector<64x128xbf16>
    %cst_20 = arith.constant dense<0.000000e+00> : vector<8x128xf32>
    %27 = tpu.matmul %25, %26, %cst_20 {dimension_numbers = #tpu.dot_dimension_numbers<[1], [0], [0], [1], [0, 0, 1, 1], [], []>} : vector<8x64xbf16>, vector<64x128xbf16>, vector<8x128xf32> -> vector<8x128xf32>
    %c0_21 = arith.constant 0 : index
    %c0_22 = arith.constant 0 : index
    %28 = vector.load %arg9[%c0_21, %c0_22] : memref<1x128xf32, #tpu.memory_space<vmem>>, vector<1x128xf32>
    %29 = vector.broadcast %28 : vector<1x128xf32> to vector<8x128xf32>
    %30 = arith.addf %27, %29 : vector<8x128xf32>
    %c0_23 = arith.constant 0 : index
    %c0_24 = arith.constant 0 : index
    %31 = vector.load %arg10[%c0_23, %c0_24] : memref<8x128xf32, #tpu.memory_space<vmem>>, vector<8x128xf32>
    tpu.vector_store %arg10[%c0_23, %c0_24], %30 {strides = array<i32>} : memref<8x128xf32, #tpu.memory_space<vmem>>, vector<8x128xf32>,
    return
  }
  func.func @transform_0(%arg0: i32) -> (i32, i32) {
    %c0_i32 = arith.constant 0 : i32
    %c0_i32_0 = arith.constant 0 : i32
    return %arg0, %c0_i32 : i32, i32
  }
  func.func @transform_1(%arg0: i32) -> (i32, i32) {
    %c0_i32 = arith.constant 0 : i32
    %c0_i32_0 = arith.constant 0 : i32
    %c0_i32_1 = arith.constant 0 : i32
    return %c0_i32, %c0_i32_0 : i32, i32
  }
  func.func @transform_2(%arg0: i32) -> (i32, i32) {
    %c0_i32 = arith.constant 0 : i32
    %c0_i32_0 = arith.constant 0 : i32
    %c0_i32_1 = arith.constant 0 : i32
    return %c0_i32, %c0_i32_0 : i32, i32
  }
  func.func @transform_3(%arg0: i32) -> (i32, i32) {
    %c0_i32 = arith.constant 0 : i32
    %c0_i32_0 = arith.constant 0 : i32
    %c0_i32_1 = arith.constant 0 : i32
    return %c0_i32, %c0_i32_0 : i32, i32
  }
  func.func @transform_4(%arg0: i32) -> (i32, i32) {
    %c0_i32 = arith.constant 0 : i32
    %c0_i32_0 = arith.constant 0 : i32
    %c0_i32_1 = arith.constant 0 : i32
    return %c0_i32, %c0_i32_0 : i32, i32
  }
  func.func @transform_5(%arg0: i32) -> (i32, i32) {
    %c0_i32 = arith.constant 0 : i32
    %c0_i32_0 = arith.constant 0 : i32
    %c0_i32_1 = arith.constant 0 : i32
    return %c0_i32, %c0_i32_0 : i32, i32
  }
  func.func @transform_6(%arg0: i32) -> (i32, i32) {
    %c0_i32 = arith.constant 0 : i32
    %c0_i32_0 = arith.constant 0 : i32
    %c0_i32_1 = arith.constant 0 : i32
    return %c0_i32, %c0_i32_0 : i32, i32
  }
  func.func @transform_7(%arg0: i32) -> (i32, i32) {
    %c0_i32 = arith.constant 0 : i32
    %c0_i32_0 = arith.constant 0 : i32
    %c0_i32_1 = arith.constant 0 : i32
    return %c0_i32, %c0_i32_0 : i32, i32
  }
  func.func @transform_8(%arg0: i32) -> (i32, i32) {
    %c0_i32 = arith.constant 0 : i32
    %c0_i32_0 = arith.constant 0 : i32
    %c0_i32_1 = arith.constant 0 : i32
    return %c0_i32, %c0_i32_0 : i32, i32
  }
  func.func @transform_9(%arg0: i32) -> (i32, i32) {
    %c0_i32 = arith.constant 0 : i32
    %c0_i32_0 = arith.constant 0 : i32
    return %arg0, %c0_i32 : i32, i32
  }
}

</mosaic_0001>

<llo_original>
// kernel: dqn_forward.1
$region0: #{dqn_forward.1}
  #allocation0 [shape = 'u32[]', space=smem, size = 0x4, offset = 0x4, fixed_abs, tag = 'smem constant byte address 0x4 - core index']
  #allocation1 [shape = 'u32[144,128]{1,0:T(1,128)}', space=vmem, size = 0x12000, scoped, tag = 'internal scratch']
  %s0 = inlined_call_operand.vmem [shape: f32[8,16], index: 0, kind: input, shape index: {}]
  %s1 = inlined_call_operand.hbm [shape: bf16[16,128], index: 1, kind: input, shape index: {}]
  %s2 = inlined_call_operand.vmem [shape: f32[1,128], index: 2, kind: input, shape index: {}]
  %s3 = inlined_call_operand.vmem [shape: bf16[128,128], index: 3, kind: input, shape index: {}]
  %s4 = inlined_call_operand.vmem [shape: f32[1,128], index: 4, kind: input, shape index: {}]
  %s5 = inlined_call_operand.vmem [shape: bf16[128,64], index: 5, kind: input, shape index: {}]
  %s6 = inlined_call_operand.vmem [shape: f32[1,64], index: 6, kind: input, shape index: {}]
  %s7 = inlined_call_operand.vmem [shape: bf16[64,128], index: 7, kind: input, shape index: {}]
  %s8 = inlined_call_operand.vmem [shape: f32[1,128], index: 8, kind: input, shape index: {}]
  %s9 = inlined_call_operand.vmem [shape: f32[8,128], index: 9, kind: output, shape index: {}]
  %s10 = sld [smem:[#allocation0]]
  $region50: #{dqn_forward.1} parent=0
    _
  %s12 = ssub.s32 1, %s10
  %s13 = scalar_select 0, %s12, %s10
  $region1: #{dqn_forward.1} parent=0
    #allocation2 [shape = 'u8[4096]{0}', space=vmem, size = 0x1000, scoped, tag = 'input window, operand 1, single buffered']
    #allocation3 [shape = 's32[1]{0}', space=sflag, size = 0x4, scoped, tag = 'scoped memory for dqn_forward.1']
    %14 = vsyncpa [#allocation3], 0
    // Predicated region
    $region2: #{dqn_forward.1} parent=1 // pred_check
      _
    $region3: #{dqn_forward.1} parent=1 // pred_check_branch
      %16 = sbr.rel (0) target = $region5
    $region4: #{dqn_forward.1} parent=1 // pred_region
      _
    $region5: #{dqn_forward.1} parent=1 // pred_fallthru
      _
    // Predicated region
    $region6: #{dqn_forward.1} parent=1 // pred_check
      _
    $region7: #{dqn_forward.1} parent=1 // pred_check_branch
      %18 = sbr.rel (0) target = $region9
    $region8: #{dqn_forward.1} parent=1 // pred_region
      %s20 = ssub.s32 128, 128
      %21 = vsyncadd [#allocation3], %s20
      %s22 = sshll.u32 [#allocation2], 4
      %s23 = int_to_ptr.vmem [resolvable:$true] %s22
      %28 = dma.hbm_to_vmem [thread:$0]  %s1, 128, %s23, [#allocation3], 64, 64, 4
    $region9: #{dqn_forward.1} parent=1 // pred_fallthru
      _
    // Predicated region
    $region10: #{dqn_forward.1} parent=1 // pred_check
      _
    $region11: #{dqn_forward.1} parent=1 // pred_check_branch
      %30 = sbr.rel (0) target = $region13
    $region12: #{dqn_forward.1} parent=1 // pred_region
      _
    $region13: #{dqn_forward.1} parent=1 // pred_fallthru
      _
    // Predicated region
    $region14: #{dqn_forward.1} parent=1 // pred_check
      _
    $region15: #{dqn_forward.1} parent=1 // pred_check_branch
      %32 = sbr.rel (0) target = $region17
    $region16: #{dqn_forward.1} parent=1 // pred_region
      _
    $region17: #{dqn_forward.1} parent=1 // pred_fallthru
      _
    // Predicated region
    $region18: #{dqn_forward.1} parent=1 // pred_check
      _
    $region19: #{dqn_forward.1} parent=1 // pred_check_branch
      %34 = sbr.rel (0) target = $region21
    $region20: #{dqn_forward.1} parent=1 // pred_region
      _
    $region21: #{dqn_forward.1} parent=1 // pred_fallthru
      _
    // Predicated region
    $region22: #{dqn_forward.1} parent=1 // pred_check
      _
    $region23: #{dqn_forward.1} parent=1 // pred_check_branch
      %36 = sbr.rel (0) target = $region25
    $region24: #{dqn_forward.1} parent=1 // pred_region
      _
    $region25: #{dqn_forward.1} parent=1 // pred_fallthru
      _
    // Predicated region
    $region26: #{dqn_forward.1} parent=1 // pred_check
      _
    $region27: #{dqn_forward.1} parent=1 // pred_check_branch
      %38 = sbr.rel (0) target = $region29
    $region28: #{dqn_forward.1} parent=1 // pred_region
      _
    $region29: #{dqn_forward.1} parent=1 // pred_fallthru
      _
    // Predicated region
    $region30: #{dqn_forward.1} parent=1 // pred_check
      _
    $region31: #{dqn_forward.1} parent=1 // pred_check_branch
      %40 = sbr.rel (0) target = $region33
    $region32: #{dqn_forward.1} parent=1 // pred_region
      _
    $region33: #{dqn_forward.1} parent=1 // pred_fallthru
      _
    // Predicated region
    $region34: #{dqn_forward.1} parent=1 // pred_check
      _
    $region35: #{dqn_forward.1} parent=1 // pred_check_branch
      %42 = sbr.rel (0) target = $region37
    $region36: #{dqn_forward.1} parent=1 // pred_region
      _
    $region37: #{dqn_forward.1} parent=1 // pred_fallthru
      _
    // Predicated region
    $region38: #{dqn_forward.1} parent=1 // pred_check
      _
    $region39: #{dqn_forward.1} parent=1 // pred_check_branch
      %44 = sbr.rel (0) target = $region41
    $region40: #{dqn_forward.1} parent=1 // pred_region
      %45 = dma.done [#allocation3], 128
    $region41: #{dqn_forward.1} parent=1 // pred_fallthru
      _
    %v47 = vld [vmem:[%s0] sm:$0xff]
    %v48 = vpack.c.bf16 %v47, %v47
    %v49 = vld [vmem:[#allocation2] sm:$0xf]
    %v50 = vld [vmem:[#allocation2 + $0x4] sm:$0xf]
    %v51 = vld [vmem:[%s2] sm:$0x1]
    %v53 = vlaneseq
    %v54 = vshrl.u32 %v53, 7
    %v55 = vsub.s32 0, %v54
    %v56 = vrot.slane %v51, %v55
    %v60 = vunpack.c.l.b16 %v49
    %v61 = vunpack.c.l.b16 %v50
    %v62 = vpack.c.b16 %v61, %v60
    %vm64 = vcmask 130048
    %v66 = vsel %vm64, %v48, 0
    %68 = vmatprep.subr.bf16.mxu0 0
    %69 = vmatpush1.bf16.msra.mxu0 %v62
    %70 = vmatprep.subr.bf16.mxu0 0
    %71 = vmatpush1.bf16.msra.mxu0 0
    %72 = vmatprep.subr.bf16.mxu0 0
    %73 = vmatpush1.bf16.msra.mxu0 0
    %74 = vmatprep.subr.bf16.mxu0 0
    %75 = vmatpush1.bf16.msra.mxu0 0
    %76 = vmatprep.subr.bf16.mxu0 0
    %77 = vmatpush1.bf16.msra.mxu0 0
    %78 = vmatprep.subr.bf16.mxu0 0
    %79 = vmatpush1.bf16.msra.mxu0 0
    %80 = vmatprep.subr.bf16.mxu0 0
    %81 = vmatpush1.bf16.msra.mxu0 0
    %82 = vmatprep.subr.bf16.mxu0 0
    %83 = vmatpush1.bf16.msra.mxu0 0
    %84 = vmatprep.subr.bf16.mxu0 0
    %85 = vmatpush1.bf16.msra.mxu0 0
    %86 = vmatprep.subr.bf16.mxu0 0
    %87 = vmatpush1.bf16.msra.mxu0 0
    %88 = vmatprep.subr.bf16.mxu0 0
    %89 = vmatpush1.bf16.msra.mxu0 0
    %90 = vmatprep.subr.bf16.mxu0 0
    %91 = vmatpush1.bf16.msra.mxu0 0
    %92 = vmatprep.subr.bf16.mxu0 0
    %93 = vmatpush1.bf16.msra.mxu0 0
    %94 = vmatprep.subr.bf16.mxu0 0
    %95 = vmatpush1.bf16.msra.mxu0 0
    %96 = vmatprep.subr.bf16.mxu0 0
    %97 = vmatpush1.bf16.msra.mxu0 0
    %98 = vmatprep.subr.bf16.mxu0 0
    %99 = vmatpush1.bf16.msra.mxu0 0
    %100 = vmatprep.mubr.bf16.mxu0 0
    %101 = vmatmul.mubr.bf16.gmra.mrb[0].mxu0 %v66
    %v102 = vpop.f32.mrb[0].mxu0
    %v103 = vadd.f32 %v56, %v102
    %v104 = vpop.f32.mrb[0].mxu0
    %v105 = vpop.f32.mrb[0].mxu0
    %v106 = vpop.f32.mrb[0].mxu0
    %107 = vdwg.mxu0
    %v108 = vmax.f32 %v103, 0.0
    %v109 = vpack.c.bf16 %v108, %v108
    %v110 = vld [vmem:[%s3] sm:$0xf]
    %v111 = vld [vmem:[%s3 + $0x4] sm:$0xf]
    %v112 = vld [vmem:[%s3 + $0x8] sm:$0xf]
    %v113 = vld [vmem:[%s3 + $0xc] sm:$0xf]
    %v114 = vld [vmem:[%s3 + $0x10] sm:$0xf]
    %v115 = vld [vmem:[%s3 + $0x14] sm:$0xf]
    %v116 = vld [vmem:[%s3 + $0x18] sm:$0xf]
    %v117 = vld [vmem:[%s3 + $0x1c] sm:$0xf]
    %v118 = vld [vmem:[%s3 + $0x20] sm:$0xf]
    %v119 = vld [vmem:[%s3 + $0x24] sm:$0xf]
    %v120 = vld [vmem:[%s3 + $0x28] sm:$0xf]
    %v121 = vld [vmem:[%s3 + $0x2c] sm:$0xf]
    %v122 = vld [vmem:[%s3 + $0x30] sm:$0xf]
    %v123 = vld [vmem:[%s3 + $0x34] sm:$0xf]
    %v124 = vld [vmem:[%s3 + $0x38] sm:$0xf]
    %v125 = vld [vmem:[%s3 + $0x3c] sm:$0xf]
    %v126 = vld [vmem:[%s4] sm:$0x1]
    %v128 = vlaneseq
    %v129 = vshrl.u32 %v128, 7
    %v130 = vsub.s32 0, %v129
    %v131 = vrot.slane %v126, %v130
    %v149 = vunpack.c.l.b16 %v110
    %v150 = vunpack.c.l.b16 %v111
    %v151 = vunpack.c.l.b16 %v112
    %v152 = vunpack.c.l.b16 %v113
    %v153 = vunpack.c.l.b16 %v114
    %v154 = vunpack.c.l.b16 %v115
    %v155 = vunpack.c.l.b16 %v116
    %v156 = vunpack.c.l.b16 %v117
    %v157 = vunpack.c.l.b16 %v118
    %v158 = vunpack.c.l.b16 %v119
    %v159 = vunpack.c.l.b16 %v120
    %v160 = vunpack.c.l.b16 %v121
    %v161 = vunpack.c.l.b16 %v122
    %v162 = vunpack.c.l.b16 %v123
    %v163 = vunpack.c.l.b16 %v124
    %v164 = vunpack.c.l.b16 %v125
    %v165 = vpack.c.b16 %v150, %v149
    %v166 = vpack.c.b16 %v152, %v151
    %v167 = vpack.c.b16 %v154, %v153
    %v168 = vpack.c.b16 %v156, %v155
    %v169 = vpack.c.b16 %v158, %v157
    %v170 = vpack.c.b16 %v160, %v159
    %v171 = vpack.c.b16 %v162, %v161
    %v172 = vpack.c.b16 %v164, %v163
    %181 = vmatprep.subr.bf16.mxu0 0
    %182 = vmatpush1.bf16.msra.mxu0 %v165
    %183 = vmatprep.subr.bf16.mxu0 0
    %184 = vmatpush1.bf16.msra.mxu0 %v166
    %185 = vmatprep.subr.bf16.mxu0 0
    %186 = vmatpush1.bf16.msra.mxu0 %v167
    %187 = vmatprep.subr.bf16.mxu0 0
    %188 = vmatpush1.bf16.msra.mxu0 %v168
    %189 = vmatprep.subr.bf16.mxu0 0
    %190 = vmatpush1.bf16.msra.mxu0 %v169
    %191 = vmatprep.subr.bf16.mxu0 0
    %192 = vmatpush1.bf16.msra.mxu0 %v170
    %193 = vmatprep.subr.bf16.mxu0 0
    %194 = vmatpush1.bf16.msra.mxu0 %v171
    %195 = vmatprep.subr.bf16.mxu0 0
    %196 = vmatpush1.bf16.msra.mxu0 %v172
    %197 = vmatprep.subr.bf16.mxu0 0
    %198 = vmatpush1.bf16.msra.mxu0 0
    %199 = vmatprep.subr.bf16.mxu0 0
    %200 = vmatpush1.bf16.msra.mxu0 0
    %201 = vmatprep.subr.bf16.mxu0 0
    %202 = vmatpush1.bf16.msra.mxu0 0
    %203 = vmatprep.subr.bf16.mxu0 0
    %204 = vmatpush1.bf16.msra.mxu0 0
    %205 = vmatprep.subr.bf16.mxu0 0
    %206 = vmatpush1.bf16.msra.mxu0 0
    %207 = vmatprep.subr.bf16.mxu0 0
    %208 = vmatpush1.bf16.msra.mxu0 0
    %209 = vmatprep.subr.bf16.mxu0 0
    %210 = vmatpush1.bf16.msra.mxu0 0
    %211 = vmatprep.subr.bf16.mxu0 0
    %212 = vmatpush1.bf16.msra.mxu0 0
    %213 = vmatprep.mubr.bf16.mxu0 0
    %214 = vmatmul.mubr.bf16.gmra.mrb[0].mxu0 %v109
    %v215 = vpop.f32.mrb[0].mxu0
    %v216 = vadd.f32 %v131, %v215
    %v217 = vpop.f32.mrb[0].mxu0
    %v218 = vpop.f32.mrb[0].mxu0
    %v219 = vpop.f32.mrb[0].mxu0
    %220 = vdwg.mxu0
    %v221 = vmax.f32 %v216, 0.0
    %v222 = vpack.c.bf16 %v221, %v221
    %v223 = vld [vmem:[%s5] sm:$0xf]
    %v224 = vld [vmem:[%s5 + $0x4] sm:$0xf]
    %v225 = vld [vmem:[%s5 + $0x8] sm:$0xf]
    %v226 = vld [vmem:[%s5 + $0xc] sm:$0xf]
    %v227 = vld [vmem:[%s5 + $0x10] sm:$0xf]
    %v228 = vld [vmem:[%s5 + $0x14] sm:$0xf]
    %v229 = vld [vmem:[%s5 + $0x18] sm:$0xf]
    %v230 = vld [vmem:[%s5 + $0x1c] sm:$0xf]
    %v231 = vld [vmem:[%s5 + $0x20] sm:$0xf]
    %v232 = vld [vmem:[%s5 + $0x24] sm:$0xf]
    %v233 = vld [vmem:[%s5 + $0x28] sm:$0xf]
    %v234 = vld [vmem:[%s5 + $0x2c] sm:$0xf]
    %v235 = vld [vmem:[%s5 + $0x30] sm:$0xf]
    %v236 = vld [vmem:[%s5 + $0x34] sm:$0xf]
    %v237 = vld [vmem:[%s5 + $0x38] sm:$0xf]
    %v238 = vld [vmem:[%s5 + $0x3c] sm:$0xf]
    %v239 = vld [vmem:[%s6] sm:$0x1]
    %v241 = vlaneseq
    %v242 = vshrl.u32 %v241, 7
    %v243 = vsub.s32 0, %v242
    %v244 = vrot.slane %v239, %v243
    %v262 = vunpack.c.l.b16 %v223
    %v263 = vunpack.c.l.b16 %v224
    %v264 = vunpack.c.l.b16 %v225
    %v265 = vunpack.c.l.b16 %v226
    %v266 = vunpack.c.l.b16 %v227
    %v267 = vunpack.c.l.b16 %v228
    %v268 = vunpack.c.l.b16 %v229
    %v269 = vunpack.c.l.b16 %v230
    %v270 = vunpack.c.l.b16 %v231
    %v271 = vunpack.c.l.b16 %v232
    %v272 = vunpack.c.l.b16 %v233
    %v273 = vunpack.c.l.b16 %v234
    %v274 = vunpack.c.l.b16 %v235
    %v275 = vunpack.c.l.b16 %v236
    %v276 = vunpack.c.l.b16 %v237
    %v277 = vunpack.c.l.b16 %v238
    %v278 = vpack.c.b16 %v263, %v262
    %v279 = vpack.c.b16 %v265, %v264
    %v280 = vpack.c.b16 %v267, %v266
    %v281 = vpack.c.b16 %v269, %v268
    %v282 = vpack.c.b16 %v271, %v270
    %v283 = vpack.c.b16 %v273, %v272
    %v284 = vpack.c.b16 %v275, %v274
    %v285 = vpack.c.b16 %v277, %v276
    %294 = vmatprep.subr.bf16.mxu0 0
    %295 = vmatpush1.bf16.msra.mxu0 %v278
    %296 = vmatprep.subr.bf16.mxu0 0
    %297 = vmatpush1.bf16.msra.mxu0 %v279
    %298 = vmatprep.subr.bf16.mxu0 0
    %299 = vmatpush1.bf16.msra.mxu0 %v280
    %300 = vmatprep.subr.bf16.mxu0 0
    %301 = vmatpush1.bf16.msra.mxu0 %v281
    %302 = vmatprep.subr.bf16.mxu0 0
    %303 = vmatpush1.bf16.msra.mxu0 %v282
    %304 = vmatprep.subr.bf16.mxu0 0
    %305 = vmatpush1.bf16.msra.mxu0 %v283
    %306 = vmatprep.subr.bf16.mxu0 0
    %307 = vmatpush1.bf16.msra.mxu0 %v284
    %308 = vmatprep.subr.bf16.mxu0 0
    %309 = vmatpush1.bf16.msra.mxu0 %v285
    %310 = vmatprep.subr.bf16.mxu0 0
    %311 = vmatpush1.bf16.msra.mxu0 0
    %312 = vmatprep.subr.bf16.mxu0 0
    %313 = vmatpush1.bf16.msra.mxu0 0
    %314 = vmatprep.subr.bf16.mxu0 0
    %315 = vmatpush1.bf16.msra.mxu0 0
    %316 = vmatprep.subr.bf16.mxu0 0
    %317 = vmatpush1.bf16.msra.mxu0 0
    %318 = vmatprep.subr.bf16.mxu0 0
    %319 = vmatpush1.bf16.msra.mxu0 0
    %320 = vmatprep.subr.bf16.mxu0 0
    %321 = vmatpush1.bf16.msra.mxu0 0
    %322 = vmatprep.subr.bf16.mxu0 0
    %323 = vmatpush1.bf16.msra.mxu0 0
    %324 = vmatprep.subr.bf16.mxu0 0
    %325 = vmatpush1.bf16.msra.mxu0 0
    %326 = vmatprep.mubr.bf16.mxu0 0
    %327 = vmatmul.mubr.bf16.gmra.mrb[0].mxu0 %v222
    %v328 = vpop.f32.mrb[0].mxu0
    %v329 = vadd.f32 %v244, %v328
    %v330 = vpop.f32.mrb[0].mxu0
    %v331 = vpop.f32.mrb[0].mxu0
    %v332 = vpop.f32.mrb[0].mxu0
    %333 = vdwg.mxu0
    %v334 = vmax.f32 %v329, 0.0
    %v335 = vpack.c.bf16 %v334, %v334
    %v336 = vld [vmem:[%s7] sm:$0xf]
    %v337 = vld [vmem:[%s7 + $0x4] sm:$0xf]
    %v338 = vld [vmem:[%s7 + $0x8] sm:$0xf]
    %v339 = vld [vmem:[%s7 + $0xc] sm:$0xf]
    %v340 = vld [vmem:[%s7 + $0x10] sm:$0xf]
    %v341 = vld [vmem:[%s7 + $0x14] sm:$0xf]
    %v342 = vld [vmem:[%s7 + $0x18] sm:$0xf]
    %v343 = vld [vmem:[%s7 + $0x1c] sm:$0xf]
    %v344 = vld [vmem:[%s8] sm:$0x1]
    %v346 = vlaneseq
    %v347 = vshrl.u32 %v346, 7
    %v348 = vsub.s32 0, %v347
    %v349 = vrot.slane %v344, %v348
    %v359 = vunpack.c.l.b16 %v336
    %v360 = vunpack.c.l.b16 %v337
    %v361 = vunpack.c.l.b16 %v338
    %v362 = vunpack.c.l.b16 %v339
    %v363 = vunpack.c.l.b16 %v340
    %v364 = vunpack.c.l.b16 %v341
    %v365 = vunpack.c.l.b16 %v342
    %v366 = vunpack.c.l.b16 %v343
    %v367 = vpack.c.b16 %v360, %v359
    %v368 = vpack.c.b16 %v362, %v361
    %v369 = vpack.c.b16 %v364, %v363
    %v370 = vpack.c.b16 %v366, %v365
    %vm375 = vcmask 523264
    %v377 = vsel %vm375, %v335, 0
    %379 = vmatprep.subr.bf16.mxu0 0
    %380 = vmatpush1.bf16.msra.mxu0 %v367
    %381 = vmatprep.subr.bf16.mxu0 0
    %382 = vmatpush1.bf16.msra.mxu0 %v368
    %383 = vmatprep.subr.bf16.mxu0 0
    %384 = vmatpush1.bf16.msra.mxu0 %v369
    %385 = vmatprep.subr.bf16.mxu0 0
    %386 = vmatpush1.bf16.msra.mxu0 %v370
    %387 = vmatprep.subr.bf16.mxu0 0
    %388 = vmatpush1.bf16.msra.mxu0 0
    %389 = vmatprep.subr.bf16.mxu0 0
    %390 = vmatpush1.bf16.msra.mxu0 0
    %391 = vmatprep.subr.bf16.mxu0 0
    %392 = vmatpush1.bf16.msra.mxu0 0
    %393 = vmatprep.subr.bf16.mxu0 0
    %394 = vmatpush1.bf16.msra.mxu0 0
    %395 = vmatprep.subr.bf16.mxu0 0
    %396 = vmatpush1.bf16.msra.mxu0 0
    %397 = vmatprep.subr.bf16.mxu0 0
    %398 = vmatpush1.bf16.msra.mxu0 0
    %399 = vmatprep.subr.bf16.mxu0 0
    %400 = vmatpush1.bf16.msra.mxu0 0
    %401 = vmatprep.subr.bf16.mxu0 0
    %402 = vmatpush1.bf16.msra.mxu0 0
    %403 = vmatprep.subr.bf16.mxu0 0
    %404 = vmatpush1.bf16.msra.mxu0 0
    %405 = vmatprep.subr.bf16.mxu0 0
    %406 = vmatpush1.bf16.msra.mxu0 0
    %407 = vmatprep.subr.bf16.mxu0 0
    %408 = vmatpush1.bf16.msra.mxu0 0
    %409 = vmatprep.subr.bf16.mxu0 0
    %410 = vmatpush1.bf16.msra.mxu0 0
    %411 = vmatprep.mubr.bf16.mxu0 0
    %412 = vmatmul.mubr.bf16.gmra.mrb[0].mxu0 %v377
    %v413 = vpop.f32.mrb[0].mxu0
    %v414 = vadd.f32 %v349, %v413
    %v415 = vpop.f32.mrb[0].mxu0
    %v416 = vpop.f32.mrb[0].mxu0
    %v417 = vpop.f32.mrb[0].mxu0
    %418 = vdwg.mxu0
    %419 = vst [vmem:[%s9] sm:$0xff] %v414
    // Predicated region
    $region42: #{dqn_forward.1} parent=1 // pred_check
      _
    $region43: #{dqn_forward.1} parent=1 // pred_check_branch
      %421 = sbr.rel (0) target = $region45
    $region44: #{dqn_forward.1} parent=1 // pred_region
      _
    $region45: #{dqn_forward.1} parent=1 // pred_fallthru
      _
    // Predicated region
    $region46: #{dqn_forward.1} parent=1 // pred_check
      _
    $region47: #{dqn_forward.1} parent=1 // pred_check_branch
      %423 = sbr.rel (0) target = $region49
    $region48: #{dqn_forward.1} parent=1 // pred_region
      _
    $region49: #{dqn_forward.1} parent=1 // pred_fallthru
      _
    %424 = vsyncpa [#allocation3], 1

</llo_original>
